<compile_context>
chip_gen: v5e
topology: v5e:2x2
jax: 0.10.0
libtpu: 0.0.40
codegen_flags: <defaults>
</compile_context>

<pallas_src>
import functools

import jax
import jax.numpy as jnp
from jax.experimental import pallas as pl
from jax.experimental.pallas import tpu as pltpu

_LANE = 128


def _focal_smooth_kernel(x_ref, lbl_ref, out_ref, acc_ref, *,
                         num_classes, gamma, lb_smooth, ignore_index, mask_pad):
    j = pl.program_id(1)

    @pl.when(j == 0)
    def _():
        acc_ref[...] = jnp.zeros_like(acc_ref)

    x = x_ref[...].astype(jnp.float32)          # (C, ts, 128)  cast in-kernel
    lbl = lbl_ref[...]                          # (ts, 128) int32

    invalid = None
    if ignore_index is not None:
        invalid = (lbl == ignore_index)
    if mask_pad:
        pad_mask = lbl < 0                      # sentinel for padded pixels
        invalid = pad_mask if invalid is None else (invalid | pad_mask)
    if invalid is not None:
        lbl = jnp.where(invalid, 0, lbl)

    # one-hot over the (leading) class axis via broadcasted iota.
    cls_idx = jax.lax.broadcasted_iota(jnp.int32, x.shape, 0)   # (C, ts, 128)
    one_hot = cls_idx == lbl                                     # broadcast lbl

    # log-sum-exp over the class axis (leading axis -> pure VALU reduce tree).
    m = jnp.max(x, axis=0)                       # (ts, 128)
    e = jnp.exp(x - m)                           # (C, ts, 128)
    s = jnp.sum(e, axis=0)                       # (ts, 128)
    log_z = m + jnp.log(s)                       # (ts, 128)

    x_t = jnp.sum(jnp.where(one_hot, x, 0.0), axis=0)    # target-class logit
    e_t = jnp.sum(jnp.where(one_hot, e, 0.0), axis=0)    # exp(x_t - m)
    sum_x = jnp.sum(x, axis=0)

    logp_t = x_t - log_z                         # log_softmax at target class
    p_t = e_t / s                                # softmax at target class

    # focal difficulty only on the target column; avoid jnp.power for int gamma.
    gamma_f = float(gamma)
    if gamma_f == 0.0:
        diff = jnp.ones_like(p_t)
    elif gamma_f == 1.0:
        diff = 1.0 - p_t
    elif gamma_f == 2.0:
        omp = 1.0 - p_t
        diff = omp * omp
    else:
        diff = jnp.power(1.0 - p_t, jnp.float32(gamma_f))

    lb_pos = jnp.float32(1.0 - lb_smooth)
    lb_neg = jnp.float32(lb_smooth / (num_classes - 1))

    # difficulty == 1 for every non-target class, so the per-pixel class sum
    # collapses to two row terms (sum_c logp_c = sum_x - C*logZ).
    other = (sum_x - jnp.float32(num_classes) * log_z) - logp_t
    loss = -(lb_pos * diff * logp_t + lb_neg * other)    # (ts, 128)

    if invalid is not None:
        loss = jnp.where(invalid, 0.0, loss)

    # Per-lane accumulation; defer the cross-lane reduce + scalar store to the
    # last row-tile of this batch.
    acc_ref[...] += loss

    @pl.when(j == pl.num_programs(1) - 1)
    def _():
        out_ref[...] = jnp.sum(acc_ref[...], keepdims=True)


def _pick_row_tile(num_rows, num_classes, itemsize, target_block_bytes):
    """Largest sublane row-tile that divides num_rows, is a multiple of 8 (or the
    full extent) and keeps the logits block under target_block_bytes."""
    max_ts = max(8, target_block_bytes // (num_classes * _LANE * itemsize))
    max_ts -= max_ts % 8
    max_ts = max(max_ts, 8)
    if num_rows <= max_ts:
        return num_rows
    for t in range(max_ts, 7, -8):
        if num_rows % t == 0:
            return t
    # TODO(synk): pad the row axis instead of falling back to one huge block.
    return num_rows


def focal_loss_with_smoothing(logits, label, *, num_classes, gamma=1,
                              lb_smooth=0.1, ignore_index=None,
                              target_block_bytes=4 << 20):
    """Matches FocalLossWithSmoothing.forward.

    size_average / alpha are unused in the PyTorch forward, so they are not
    parameters here.  As in the PyTorch module, ignored pixels contribute 0 to
    the sum but the mean still divides by the total pixel count (loss.mean()).
    """
    B, C, H, W = logits.shape
    assert C == num_classes
    HW = H * W
    N = B * HW

    rows = -(-HW // _LANE)                      # ceil(HW / 128)
    pad = rows * _LANE - HW

    x = logits.reshape(B, C, HW)                # free reshape of native NCHW
    lbl = label.reshape(B, HW).astype(jnp.int32)
    if pad:
        # Padded pixels get label sentinel -1, are masked in-kernel and the
        # mean still divides by the true pixel count N.
        x = jnp.pad(x, ((0, 0), (0, 0), (0, pad)))
        lbl = jnp.pad(lbl, ((0, 0), (0, pad)), constant_values=-1)
    x = x.reshape(B, C, rows, _LANE)
    lbl = lbl.reshape(B, rows, _LANE)

    ts = _pick_row_tile(rows, C, jnp.dtype(x.dtype).itemsize, target_block_bytes)
    num_row_tiles = rows // ts

    kernel = functools.partial(
        _focal_smooth_kernel,
        num_classes=num_classes, gamma=gamma, lb_smooth=lb_smooth,
        ignore_index=ignore_index, mask_pad=pad > 0)

    partials = pl.pallas_call(
        kernel,
        out_shape=jax.ShapeDtypeStruct((B, 1, 1), jnp.float32),
        grid_spec=pltpu.PrefetchScalarGridSpec(
            num_scalar_prefetch=0,
            grid=(B, num_row_tiles),
            in_specs=[
                pl.BlockSpec((None, C, ts, _LANE), lambda b, j: (b, 0, j, 0)),
                pl.BlockSpec((None, ts, _LANE), lambda b, j: (b, j, 0)),
            ],
            out_specs=pl.BlockSpec((None, 1, 1), lambda b, j: (b, 0, 0)),
            scratch_shapes=[pltpu.VMEM((ts, _LANE), jnp.float32)],
        ),
        compiler_params=pltpu.CompilerParams(
            dimension_semantics=("parallel", "arbitrary")),
    )(x, lbl)

    return jnp.sum(partials) / jnp.float32(N)


def _reference_loss(logits, label, *, num_classes, gamma, lb_smooth,
                    ignore_index=None):
    # Pure-JAX reference mirroring the PyTorch module.
    x = logits.astype(jnp.float32)
    p = jax.nn.softmax(x, axis=1)
    logsm = jax.nn.log_softmax(x, axis=1)
    lbl = label
    if ignore_index is not None:
        ignore = lbl == ignore_index
        lbl = jnp.where(ignore, 0, lbl)
    oh = jax.nn.one_hot(lbl, num_classes, axis=1, dtype=jnp.float32)
    pt = oh * p
    difficulty = (1.0 - pt) ** gamma
    lb_pos = 1.0 - lb_smooth
    lb_neg = lb_smooth / (num_classes - 1)
    lb_oh = oh * lb_pos + (1.0 - oh) * lb_neg
    loss = -jnp.sum(difficulty * logsm * lb_oh, axis=1)
    if ignore_index is not None:
        loss = jnp.where(ignore, 0.0, loss)
    return loss.mean()


if __name__ == "__main__":
    num_classes = 4
    B, H, W = 2, 16, 16

    key = jax.random.PRNGKey(0)
    k_logits, k_label = jax.random.split(key)
    logits = jax.random.normal(k_logits, (B, num_classes, H, W), dtype=jnp.float32)
    label = jax.random.randint(k_label, (B, H, W), 0, num_classes, dtype=jnp.int32)

    loss = focal_loss_with_smoothing(
        logits, label, num_classes=num_classes, gamma=1, lb_smooth=0.1)
    loss = jax.block_until_ready(loss)

    ref = _reference_loss(logits, label, num_classes=num_classes,
                          gamma=1, lb_smooth=0.1)
    assert jnp.allclose(loss, ref, rtol=1e-5, atol=1e-5), (loss, ref)

    print("KERNEL_OK")
</pallas_src>

<mosaic_0001>
module attributes {stable_mosaic.version = 11 : i64} {
  func.func @_focal_smooth_kernel(%arg0: i32, %arg1: i32, %arg2: memref<1x4x2x128xf32, #tpu.memory_space<vmem>>, %arg3: memref<1x2x128xi32, #tpu.memory_space<vmem>>, %arg4: memref<1x1x1xf32, #tpu.memory_space<vmem>>, %arg5: memref<2x128xf32, #tpu.memory_space<vmem>>) attributes {dimension_semantics = [#tpu.dimension_semantics<parallel>, #tpu.dimension_semantics<arbitrary>], iteration_bounds = array<i64: 2, 1>, scalar_prefetch = 0 : i64, scratch_operands = 1 : i64, tpu.core_type = #tpu.core_type<tc>, window_params = [{transform_indices = @transform_0, window_bounds = array<i64: 1, 4, 2, 128>}, {transform_indices = @transform_1, window_bounds = array<i64: 1, 2, 128>}, {transform_indices = @transform_2, window_bounds = array<i64: 1, 1, 1>}]} {
    %c0_i32 = arith.constant 0 : i32
    %0 = arith.cmpi eq, %arg1, %c0_i32 : i32
    %1 = arith.extui %0 : i1 to i32
    %c0_i32_0 = arith.constant 0 : i32
    %2 = arith.cmpi ne, %1, %c0_i32_0 : i32
    scf.if %2 {
      %cst_24 = arith.constant 0.000000e+00 : f32
      %48 = vector.broadcast %cst_24 : f32 to vector<2x128xf32>
      %c0_25 = arith.constant 0 : index
      %c0_26 = arith.constant 0 : index
      %49 = vector.load %arg5[%c0_25, %c0_26] : memref<2x128xf32, #tpu.memory_space<vmem>>, vector<2x128xf32>
      tpu.vector_store %arg5[%c0_25, %c0_26], %48 {strides = array<i32>} : memref<2x128xf32, #tpu.memory_space<vmem>>, vector<2x128xf32>,
    } else {
    }
    %c0 = arith.constant 0 : index
    %c0_1 = arith.constant 0 : index
    %c0_2 = arith.constant 0 : index
    %c0_3 = arith.constant 0 : index
    %3 = vector.load %arg2[%c0, %c0_1, %c0_2, %c0_3] : memref<1x4x2x128xf32, #tpu.memory_space<vmem>>, vector<1x4x2x128xf32>
    %4 = vector.shape_cast %3 : vector<1x4x2x128xf32> to vector<4x2x128xf32>
    %c0_4 = arith.constant 0 : index
    %c0_5 = arith.constant 0 : index
    %c0_6 = arith.constant 0 : index
    %5 = vector.load %arg3[%c0_4, %c0_5, %c0_6] : memref<1x2x128xi32, #tpu.memory_space<vmem>>, vector<1x2x128xi32>
    %6 = vector.shape_cast %5 : vector<1x2x128xi32> to vector<2x128xi32>
    %7 = tpu.iota {dimensions = array<i32: 0>} : vector<4x2x128xi32>
    %8 = vector.shape_cast %6 : vector<2x128xi32> to vector<1x2x128xi32>
    %9 = vector.broadcast %8 : vector<1x2x128xi32> to vector<4x2x128xi32>
    %10 = arith.cmpi eq, %7, %9 : vector<4x2x128xi32>
    %cst = arith.constant dense<0xFF800000> : vector<2x128xf32>
    %11 = vector.multi_reduction <maximumf>, %4, %cst [0] : vector<4x2x128xf32> to vector<2x128xf32>
    %12 = vector.shape_cast %11 : vector<2x128xf32> to vector<1x2x128xf32>
    %13 = vector.broadcast %12 : vector<1x2x128xf32> to vector<4x2x128xf32>
    %14 = arith.subf %4, %13 : vector<4x2x128xf32>
    %15 = math.exp %14 : vector<4x2x128xf32>
    %cst_7 = arith.constant dense<0.000000e+00> : vector<2x128xf32>
    %16 = vector.multi_reduction <add>, %15, %cst_7 [0] : vector<4x2x128xf32> to vector<2x128xf32>
    %17 = math.log %16 : vector<2x128xf32>
    %18 = arith.addf %11, %17 : vector<2x128xf32>
    %cst_8 = arith.constant 0.000000e+00 : f32
    %19 = vector.broadcast %cst_8 : f32 to vector<4x2x128xf32>
    %20 = arith.select %10, %4, %19 : vector<4x2x128xi1>, vector<4x2x128xf32>
    %cst_9 = arith.constant dense<0.000000e+00> : vector<2x128xf32>
    %21 = vector.multi_reduction <add>, %20, %cst_9 [0] : vector<4x2x128xf32> to vector<2x128xf32>
    %cst_10 = arith.constant 0.000000e+00 : f32
    %22 = vector.broadcast %cst_10 : f32 to vector<4x2x128xf32>
    %23 = arith.select %10, %15, %22 : vector<4x2x128xi1>, vector<4x2x128xf32>
    %cst_11 = arith.constant dense<0.000000e+00> : vector<2x128xf32>
    %24 = vector.multi_reduction <add>, %23, %cst_11 [0] : vector<4x2x128xf32> to vector<2x128xf32>
    %cst_12 = arith.constant dense<0.000000e+00> : vector<2x128xf32>
    %25 = vector.multi_reduction <add>, %4, %cst_12 [0] : vector<4x2x128xf32> to vector<2x128xf32>
    %26 = arith.subf %21, %18 : vector<2x128xf32>
    %27 = arith.divf %24, %16 : vector<2x128xf32>
    %cst_13 = arith.constant 1.000000e+00 : f32
    %28 = vector.broadcast %cst_13 : f32 to vector<2x128xf32>
    %29 = arith.subf %28, %27 : vector<2x128xf32>
    %cst_14 = arith.constant 4.000000e+00 : f32
    %30 = vector.broadcast %cst_14 : f32 to vector<2x128xf32>
    %31 = arith.mulf %30, %18 : vector<2x128xf32>
    %32 = arith.subf %25, %31 : vector<2x128xf32>
    %33 = arith.subf %32, %26 : vector<2x128xf32>
    %cst_15 = arith.constant 0.899999976 : f32
    %34 = vector.broadcast %cst_15 : f32 to vector<2x128xf32>
    %35 = arith.mulf %34, %29 : vector<2x128xf32>
    %36 = arith.mulf %35, %26 : vector<2x128xf32>
    %cst_16 = arith.constant 0.0333333351 : f32
    %37 = vector.broadcast %cst_16 : f32 to vector<2x128xf32>
    %38 = arith.mulf %37, %33 : vector<2x128xf32>
    %39 = arith.addf %36, %38 : vector<2x128xf32>
    %cst_17 = arith.constant 0.000000e+00 : f32
    %40 = vector.broadcast %cst_17 : f32 to vector<2x128xf32>
    %41 = arith.subf %40, %39 : vector<2x128xf32>
    %c0_18 = arith.constant 0 : index
    %c0_19 = arith.constant 0 : index
    %42 = vector.load %arg5[%c0_18, %c0_19] : memref<2x128xf32, #tpu.memory_space<vmem>>, vector<2x128xf32>
    %43 = arith.addf %42, %41 : vector<2x128xf32>
    %c0_20 = arith.constant 0 : index
    %c0_21 = arith.constant 0 : index
    %44 = vector.load %arg5[%c0_20, %c0_21] : memref<2x128xf32, #tpu.memory_space<vmem>>, vector<2x128xf32>
    tpu.vector_store %arg5[%c0_20, %c0_21], %43 {strides = array<i32>} : memref<2x128xf32, #tpu.memory_space<vmem>>, vector<2x128xf32>,
    %c0_i32_22 = arith.constant 0 : i32
    %45 = arith.cmpi eq, %arg1, %c0_i32_22 : i32
    %46 = arith.extui %45 : i1 to i32
    %c0_i32_23 = arith.constant 0 : i32
    %47 = arith.cmpi ne, %46, %c0_i32_23 : i32
    scf.if %47 {
      %c0_24 = arith.constant 0 : index
      %c0_25 = arith.constant 0 : index
      %48 = vector.load %arg5[%c0_24, %c0_25] : memref<2x128xf32, #tpu.memory_space<vmem>>, vector<2x128xf32>
      %49 = vector.shape_cast %48 : vector<2x128xf32> to vector<1x2x128xf32>
      %cst_26 = arith.constant dense<0.000000e+00> : vector<1xf32>
      %50 = vector.multi_reduction <add>, %49, %cst_26 [1, 2] : vector<1x2x128xf32> to vector<1xf32>
      %51 = vector.shape_cast %50 : vector<1xf32> to vector<1x1x1xf32>
      %52 = vector.extract %51[0, 0, 0] : f32 from vector<1x1x1xf32>
      %53 = vector.broadcast %52 : f32 to vector<1x1xf32>
      %c0_27 = arith.constant 0 : index
      %c0_28 = arith.constant 0 : index
      %c0_29 = arith.constant 0 : index
      %54 = vector.load %arg4[%c0_27, %c0_28, %c0_29] : memref<1x1x1xf32, #tpu.memory_space<vmem>>, vector<1x1x1xf32>
      %55 = vector.shape_cast %54 : vector<1x1x1xf32> to vector<1x1xf32>
      %56 = vector.shape_cast %53 : vector<1x1xf32> to vector<1x1x1xf32>
      tpu.vector_store %arg4[%c0_27, %c0_28, %c0_29], %56 {strides = array<i32>} : memref<1x1x1xf32, #tpu.memory_space<vmem>>, vector<1x1x1xf32>,
    } else {
    }
    return
  }
  func.func @transform_0(%arg0: i32, %arg1: i32) -> (i32, i32, i32, i32) {
    %c0_i32 = arith.constant 0 : i32
    %c0_i32_0 = arith.constant 0 : i32
    %c0_i32_1 = arith.constant 0 : i32
    return %arg0, %c0_i32, %arg1, %c0_i32_0 : i32, i32, i32, i32
  }
  func.func @transform_1(%arg0: i32, %arg1: i32) -> (i32, i32, i32) {
    %c0_i32 = arith.constant 0 : i32
    %c0_i32_0 = arith.constant 0 : i32
    return %arg0, %arg1, %c0_i32 : i32, i32, i32
  }
  func.func @transform_2(%arg0: i32, %arg1: i32) -> (i32, i32, i32) {
    %c0_i32 = arith.constant 0 : i32
    %c0_i32_0 = arith.constant 0 : i32
    %c0_i32_1 = arith.constant 0 : i32
    return %arg0, %c0_i32, %c0_i32_0 : i32, i32, i32
  }
}

</mosaic_0001>

<llo_original>
// kernel: tpu_custom_call.1
$region0: #{tpu_custom_call.1}
  #allocation0 [shape = 'u32[]', space=smem, size = 0x4, offset = 0x4, fixed_abs, tag = 'smem constant byte address 0x4 - core index']
  #allocation1 [shape = 'u32[72,128]{1,0:T(1,128)}', space=vmem, size = 0x9000, scoped, tag = 'internal scratch']
  #allocation2 [shape = 'f32[2,128]{1,0:T(2,128)}', space=vmem, size = 0x400, scoped, tag = 'scratch operand']
  %s0 = inlined_call_operand.hbm [shape: f32[2,4,2,128], index: 0, kind: input, shape index: {}]
  %s1 = inlined_call_operand.hbm [shape: s32[2,2,128], index: 1, kind: input, shape index: {}]
  %s2 = inlined_call_operand.vmem [shape: f32[2,1,1], index: 2, kind: output, shape index: {}]
  %s3 = sld [smem:[#allocation0]]
  $region57: #{tpu_custom_call.1} parent=0
    _
  %s5 = ssub.s32 1, %s3
  %s6 = scalar_select 0, %s5, %s3
  $region1: #{tpu_custom_call.1} parent=0
    #allocation3 [shape = 'u8[8192]{0}', space=vmem, size = 0x2000, scoped, tag = 'input window, operand 0']
    #allocation4 [shape = 's32[2]{0}', space=sflag, size = 0x8, scoped, tag = 'scoped memory for tpu_custom_call.1']
    #allocation5 [shape = 'u8[2048]{0}', space=vmem, size = 0x800, scoped, tag = 'input window, operand 1']
    #allocation6 [shape = 's32[2]{0}', space=sflag, size = 0x8, scoped, tag = 'scoped memory for tpu_custom_call.1']
    %7 = vsyncpa [#allocation4], 0
    %s8 = scalar_lea.sflag [#allocation4], 1
    %9 = vsyncpa %s8, 0
    %10 = vsyncpa [#allocation6], 0
    %s11 = scalar_lea.sflag [#allocation6], 1
    %12 = vsyncpa %s11, 0
    loop: start=0, step=1, limit=4
    $region2: #{tpu_custom_call.1} parent=1 // loop_pre_header
      _
    $region3: #{tpu_custom_call.1} parent=1 // loop_header
      %s14 = sphi 0, %s18
      %p15 = scmp.ge.s32.totalorder %s14, 4
      %s21 = sphi 0, %s33
      %s22 = sphi 0, %s29
      %s23 = sphi 0, %s21
      %s24 = sphi 0, %s22
      %s25 = sphi 0, %s23
      %s26 = sphi 0, %s24
      %s38 = sphi 0, %s40
      %s41 = sphi 0, %s38
      %s42 = sphi 0, %s41
      %s58 = sphi 0, %s42
      %s66 = sphi 0, %s68
      %s69 = sphi 0, %s66
      %s70 = sphi 0, %s69
      %s86 = sphi 0, %s70
      %s92 = sphi 0, %s94
      %s95 = sphi 0, %s92
      %s96 = sphi 0, %s95
      %s112 = sphi 0, %s96
    $region4: #{tpu_custom_call.1} parent=1 // loop_header_branch
      %17 = sbr.rel (%p15) target = $region8
    $region5: #{tpu_custom_call.1} parent=1 // loop_body
      %s19 = ssub.s32 %s14, 1
      %s20 = ssub.s32 %s14, 2
      %s27 = sadd.s32 1, %s22
      %p28 = scmp.ge.s32.totalorder %s27, 1
      %s29 = scalar_select %p28, 0, %s27
      %s30 = sadd.s32 1, %s21
      %s31 = scalar_select %p28, %s30, %s21
      %p32 = scmp.ge.s32.totalorder %s31, 2
      %s33 = scalar_select %p32, 0, %s31
      %s34 = ssub.s32 %s21, %s33
      %s35 = ssub.s32 %s22, %s29
      %s36 = sor.u32 %s34, %s35
      %p37 = scmp.eq.s32.totalorder %s36, 0
      %s39 = sadd.s32 %s38, 1
      %s40 = scalar_select %p37, %s38, %s39
      %p43 = pneg %p37
      %p44 = scmp.eq.s32.totalorder %s14, 1
      %p45 = por %p43, %p44
      %p46 = scmp.ne.s32.totalorder %s38, %s41
      %p47 = scmp.eq.s32.totalorder %s14, 0
      %p48 = por %p46, %p47
      %p49 = scmp.ne.s32.totalorder %s38, %s41
      %p50 = scmp.eq.s32.totalorder %s19, 1
      %p51 = por %p49, %p50
      %p52 = scmp.ne.s32.totalorder %s41, %s42
      %p53 = scmp.eq.s32.totalorder %s19, 0
      %p54 = por %p52, %p53
      %p55 = scmp.ne.s32.totalorder %s41, %s42
      %p56 = scmp.eq.s32.totalorder %s20, 1
      %p57 = por %p55, %p56
      %p59 = scmp.ne.s32.totalorder %s42, %s58
      %p60 = scmp.eq.s32.totalorder %s20, 0
      %p61 = por %p59, %p60
      %s62 = ssub.s32 %s21, %s33
      %s63 = ssub.s32 %s22, %s29
      %s64 = sor.u32 %s62, %s63
      %p65 = scmp.eq.s32.totalorder %s64, 0
      %s67 = sadd.s32 %s66, 1
      %s68 = scalar_select %p65, %s66, %s67
      %p71 = pneg %p65
      %p72 = scmp.eq.s32.totalorder %s14, 1
      %p73 = por %p71, %p72
      %p74 = scmp.ne.s32.totalorder %s66, %s69
      %p75 = scmp.eq.s32.totalorder %s14, 0
      %p76 = por %p74, %p75
      %p77 = scmp.ne.s32.totalorder %s66, %s69
      %p78 = scmp.eq.s32.totalorder %s19, 1
      %p79 = por %p77, %p78
      %p80 = scmp.ne.s32.totalorder %s69, %s70
      %p81 = scmp.eq.s32.totalorder %s19, 0
      %p82 = por %p80, %p81
      %p83 = scmp.ne.s32.totalorder %s69, %s70
      %p84 = scmp.eq.s32.totalorder %s20, 1
      %p85 = por %p83, %p84
      %p87 = scmp.ne.s32.totalorder %s70, %s86
      %p88 = scmp.eq.s32.totalorder %s20, 0
      %p89 = por %p87, %p88
      %s90 = ssub.s32 %s21, %s33
      %p91 = scmp.eq.s32.totalorder %s90, 0
      %s93 = sadd.s32 %s92, 1
      %s94 = scalar_select %p91, %s92, %s93
      %p97 = pneg %p91
      %p98 = scmp.eq.s32.totalorder %s14, 1
      %p99 = por %p97, %p98
      %p100 = scmp.ne.s32.totalorder %s92, %s95
      %p101 = scmp.eq.s32.totalorder %s14, 0
      %p102 = por %p100, %p101
      %p103 = scmp.ne.s32.totalorder %s92, %s95
      %p104 = scmp.eq.s32.totalorder %s19, 1
      %p105 = por %p103, %p104
      %p106 = scmp.ne.s32.totalorder %s95, %s96
      %p107 = scmp.eq.s32.totalorder %s19, 0
      %p108 = por %p106, %p107
      %p109 = scmp.ne.s32.totalorder %s95, %s96
      %p110 = scmp.eq.s32.totalorder %s20, 1
      %p111 = por %p109, %p110
      %p113 = scmp.ne.s32.totalorder %s96, %s112
      %p114 = scmp.eq.s32.totalorder %s20, 0
      %p115 = por %p113, %p114
      %p116 = scmp.le.s32.totalorder 1, %s14
      %p117 = scmp.lt.s32.totalorder %s14, 3
      %p118 = pnand %p116, %p117
      %p119 = pneg %p118
      // Predicated region
      $region9: #{tpu_custom_call.1} parent=5 // pred_check
        _
      $region10: #{tpu_custom_call.1} parent=5 // pred_check_branch
        %121 = sbr.rel (%p118) target = $region12
      $region11: #{tpu_custom_call.1} parent=5 // pred_region
        %s122 = ssub.s32 %s14, 1
      $region12: #{tpu_custom_call.1} parent=5 // pred_fallthru
        _
      %p123 = scmp.lt.s32.totalorder %s14, 2
      // Predicated region
      $region13: #{tpu_custom_call.1} parent=5 // pred_check
        %p124 = pneg %p123
      $region14: #{tpu_custom_call.1} parent=5 // pred_check_branch
        %126 = sbr.rel (%p124) target = $region16
      $region15: #{tpu_custom_call.1} parent=5 // pred_region
        // Predicated region
        $region17: #{tpu_custom_call.1} parent=15 // pred_check
          %p127 = pneg %p48
        $region18: #{tpu_custom_call.1} parent=15 // pred_check_branch
          %129 = sbr.rel (%p127) target = $region20
        $region19: #{tpu_custom_call.1} parent=15 // pred_region
          %s130 = sand.u32 %s38, 1
          %s131 = scalar_lea.sflag [#allocation4], %s130
          %s132 = sand.u32 %s38, 1
          %s133 = smul.addr %s132, 8
          %s134 = scalar_lea.vmem [#allocation3], %s133
          %136 = vsyncadd %s131, 0
          %s137 = smul.addr %s21, 4
          %s138 = sadd.s32 %s22, %s137
          %s139 = smul.addr %s138, 2
          %s140 = scalar_lea.hbm %s0, %s139
          %s141 = sshll.u32 %s140, 4
          %s142 = int_to_ptr.hbm [resolvable:$true] %s141
          %s143 = sshll.u32 %s134, 4
          %s144 = int_to_ptr.vmem [resolvable:$true] %s143
          %149 = dma.hbm_to_vmem [thread:$0]  %s142, 128, %s144, %s131, 32, 32, 2
        $region20: #{tpu_custom_call.1} parent=15 // pred_fallthru
          _
        // Predicated region
        $region21: #{tpu_custom_call.1} parent=15 // pred_check
          %p150 = pneg %p76
        $region22: #{tpu_custom_call.1} parent=15 // pred_check_branch
          %152 = sbr.rel (%p150) target = $region24
        $region23: #{tpu_custom_call.1} parent=15 // pred_region
          %s153 = sand.u32 %s66, 1
          %s154 = scalar_lea.sflag [#allocation6], %s153
          %s155 = sand.u32 %s66, 1
          %s156 = smul.addr %s155, 2
          %s157 = scalar_lea.vmem [#allocation5], %s156
          %159 = vsyncadd %s154, 0
          %s160 = sadd.s32 %s22, %s21
          %s161 = smul.addr %s160, 2
          %s162 = scalar_lea.hbm %s1, %s161
          %s164 = sshll.u32 %s162, 4
          %s165 = int_to_ptr.hbm [resolvable:$true] %s164
          %s166 = sshll.u32 %s157, 4
          %s167 = int_to_ptr.vmem [resolvable:$true] %s166
          %169 = dma.hbm_to_vmem [thread:$0]  %s165, 32, %s167, %s154
        $region24: #{tpu_custom_call.1} parent=15 // pred_fallthru
          _
      $region16: #{tpu_custom_call.1} parent=5 // pred_fallthru
        _
      %p170 = scmp.le.s32.totalorder 1, %s14
      %p171 = scmp.lt.s32.totalorder %s14, 3
      %p172 = pnand %p170, %p171
      %p173 = pneg %p172
      // Predicated region
      $region25: #{tpu_custom_call.1} parent=5 // pred_check
        _
      $region26: #{tpu_custom_call.1} parent=5 // pred_check_branch
        %175 = sbr.rel (%p172) target = $region28
      $region27: #{tpu_custom_call.1} parent=5 // pred_region
        %s176 = ssub.s32 %s14, 1
        %s177 = sand.u32 %s41, 1
        %s178 = scalar_lea.sflag [#allocation4], %s177
        %s179 = sand.u32 %s41, 1
        %s180 = smul.addr %s179, 8
        %s181 = scalar_lea.vmem [#allocation3], %s180
        // Predicated region
        $region29: #{tpu_custom_call.1} parent=27 // pred_check
          %p182 = pneg %p54
        $region30: #{tpu_custom_call.1} parent=27 // pred_check_branch
          %184 = sbr.rel (%p182) target = $region32
        $region31: #{tpu_custom_call.1} parent=27 // pred_region
          %186 = dma.done %s178, 128
        $region32: #{tpu_custom_call.1} parent=27 // pred_fallthru
          _
        %s187 = sand.u32 %s69, 1
        %s188 = scalar_lea.sflag [#allocation6], %s187
        %s189 = sand.u32 %s69, 1
        %s190 = smul.addr %s189, 2
        %s191 = scalar_lea.vmem [#allocation5], %s190
        // Predicated region
        $region33: #{tpu_custom_call.1} parent=27 // pred_check
          %p192 = pneg %p82
        $region34: #{tpu_custom_call.1} parent=27 // pred_check_branch
          %194 = sbr.rel (%p192) target = $region36
        $region35: #{tpu_custom_call.1} parent=27 // pred_region
          %196 = dma.done %s188, 32
        $region36: #{tpu_custom_call.1} parent=27 // pred_fallthru
          _
        %s197 = sand.u32 %s41, 1
        %s198 = scalar_lea.sflag [#allocation4], %s197
        %s199 = sand.u32 %s41, 1
        %s200 = smul.addr %s199, 8
        %s201 = scalar_lea.vmem [#allocation3], %s200
        %p202 = pneg %p54
        %p203 = pneg %p51
        %s204 = sand.u32 %s69, 1
        %s205 = scalar_lea.sflag [#allocation6], %s204
        %s206 = sand.u32 %s69, 1
        %s207 = smul.addr %s206, 2
        %s208 = scalar_lea.vmem [#allocation5], %s207
        %p209 = pneg %p82
        %p210 = pneg %p79
        %p211 = pneg %p108
        %p212 = pneg %p105
        %p213 = scmp.lt.s32.totalorder %s23, 1
        %s214 = scalar_select %p213, %s23, 1
        %s215 = scalar_lea.vmem %s2, %s214
        %p216 = scmp.lt.s32.totalorder %s23, 1
        %s217 = scalar_select %p216, %s23, 1
        %s218 = scalar_lea.vmem %s2, %s217
        %p219 = scmp.eq.s32.totalorder %s24, 0
        // Predicated region
        $region37: #{tpu_custom_call.1} parent=27 // pred_check
          %p220 = pneg %p219
        $region38: #{tpu_custom_call.1} parent=27 // pred_check_branch
          %222 = sbr.rel (%p220) target = $region40
        $region39: #{tpu_custom_call.1} parent=27 // pred_region
          %223 = vst [vmem:[#allocation2] sm:$0x3] 0.0
        $region40: #{tpu_custom_call.1} parent=27 // pred_fallthru
          _
        %v224 = vld [vmem:[%s181] sm:$0x3]
        %v225 = vld [vmem:[%s181 + $0x2] sm:$0x3]
        %v226 = vld [vmem:[%s181 + $0x4] sm:$0x3]
        %v227 = vld [vmem:[%s181 + $0x6] sm:$0x3]
        %v228 = vld [vmem:[%s191] sm:$0x3]
        %vm229 = vcmp.eq.s32.totalorder %v228, 0
        %vm230 = vcmp.eq.s32.totalorder %v228, 1
        %vm231 = vcmp.eq.s32.totalorder %v228, 2
        %vm232 = vcmp.eq.s32.totalorder %v228, 3
        %vm233 = vcmask 1041408
        %v234 = vsel %vm233, %v224, -inf
        %v235 = vsel %vm233, %v225, -inf
        %v236 = vsel %vm233, %v226, -inf
        %v237 = vsel %vm233, %v227, -inf
        %v238 = vmax.f32 %v234, %v235
        %v239 = vmax.f32 %v236, %v237
        %v240 = vmax.f32 %v238, %v239
        %v241 = vsub.f32 %v224, %v240
        %v242 = vsub.f32 %v225, %v240
        %v243 = vsub.f32 %v226, %v240
        %v244 = vsub.f32 %v227, %v240
        %v245 = vmul.f32 %v241, 1.442695
        %v246 = vpow.pop %v245
        %v247 = vmul.f32 %v242, 1.442695
        %v248 = vpow.pop %v247
        %v249 = vmul.f32 %v243, 1.442695
        %v250 = vpow.pop %v249
        %v251 = vmul.f32 %v244, 1.442695
        %v252 = vpow.pop %v251
        %v253 = vsel %vm233, %v246, 0.0
        %v254 = vsel %vm233, %v248, 0.0
        %v255 = vadd.f32 %v253, %v254
        %v256 = vsel %vm233, %v250, 0.0
        %v257 = vadd.f32 %v255, %v256
        %v258 = vsel %vm233, %v252, 0.0
        %v259 = vadd.f32 %v257, %v258
        %v260 = vlog2.pop %v259
        %v261 = vmul.f32 %v260, 0.6931472
        %v262 = vadd.f32 %v240, %v261
        %v263 = vsel %vm229, %v224, 0.0
        %v264 = vsel %vm230, %v225, 0.0
        %v265 = vsel %vm231, %v226, 0.0
        %v266 = vsel %vm232, %v227, 0.0
        %v267 = vsel %vm233, %v263, 0.0
        %v268 = vsel %vm233, %v264, 0.0
        %v269 = vadd.f32 %v267, %v268
        %v270 = vsel %vm233, %v265, 0.0
        %v271 = vadd.f32 %v269, %v270
        %v272 = vsel %vm233, %v266, 0.0
        %v273 = vadd.f32 %v271, %v272
        %v274 = vsel %vm229, %v246, 0.0
        %v275 = vsel %vm230, %v248, 0.0
        %v276 = vsel %vm231, %v250, 0.0
        %v277 = vsel %vm232, %v252, 0.0
        %v278 = vsel %vm233, %v274, 0.0
        %v279 = vsel %vm233, %v275, 0.0
        %v280 = vadd.f32 %v278, %v279
        %v281 = vsel %vm233, %v276, 0.0
        %v282 = vadd.f32 %v280, %v281
        %v283 = vsel %vm233, %v277, 0.0
        %v284 = vadd.f32 %v282, %v283
        %v285 = vsel %vm233, %v224, 0.0
        %v286 = vsel %vm233, %v225, 0.0
        %v287 = vadd.f32 %v285, %v286
        %v288 = vsel %vm233, %v226, 0.0
        %v289 = vadd.f32 %v287, %v288
        %v290 = vsel %vm233, %v227, 0.0
        %v291 = vadd.f32 %v289, %v290
        %v292 = vsub.f32 %v273, %v262
        %v293 = vrcp.pop %v259
        %v294 = vmul.f32 %v259, %v293
        %v295 = vsub.f32 1.0, %v294
        %v296 = vmul.f32 %v293, %v295
        %v297 = vadd.f32 %v293, %v296
        %vm298 = vweird.f32 %v259
        %vm299 = vweird.f32 %v293
        %vm300 = vmor %vm298, %vm299
        %v301 = vsel %vm300, %v293, %v297
        %v302 = vand.u32 2147483647, %v259
        %vm303 = vcmp.eq.f32.partialorder %v302, 8.507059e+37
        %v304 = vand.u32 %v259, 2147483648
        %v305 = vor.u32 1.1754944e-38, %v304
        %v306 = vsel %vm303, %v305, %v301
        %v307 = vmul.f32 %v284, %v306
        %v308 = vsub.f32 1.0, %v307
        %v309 = vmul.f32 %v262, 4.0
        %v310 = vsub.f32 %v291, %v309
        %v311 = vsub.f32 %v310, %v292
        %v312 = vmul.f32 %v308, 0.9
        %v313 = vmul.f32 %v312, %v292
        %v314 = vmul.f32 %v311, 0.033333335
        %v315 = vadd.f32 %v313, %v314
        %v316 = vsub.f32 0.0, %v315
        %v317 = vld [vmem:[#allocation2] sm:$0x3]
        %v318 = vadd.f32 %v317, %v316
        %319 = vst [vmem:[#allocation2] sm:$0x3] %v318
        // Predicated region
        $region41: #{tpu_custom_call.1} parent=27 // pred_check
          %p320 = pneg %p219
        $region42: #{tpu_custom_call.1} parent=27 // pred_check_branch
          %322 = sbr.rel (%p320) target = $region44
        $region43: #{tpu_custom_call.1} parent=27 // pred_region
          %v323 = vld [vmem:[#allocation2] sm:$0x3]
          %v324 = vsel %vm233, %v323, 0.0
          %325 = vadd.xlane.f32.xlu0 %v324
          %v326 = vpop.xlane.xlu0 %325
          %v327 = vrot.slane %v326, 4
          %v328 = vadd.f32 %v326, %v327
          %v329 = vrot.slane %v328, 2
          %v330 = vadd.f32 %v328, %v329
          %v331 = vrot.slane %v330, 1
          %v332 = vadd.f32 %v330, %v331
          %s333 = vtos %v332
          %v334 = vstv %s333
          %vm335 = vcmask 0
          %336 = vst.msk [vmem:[%s218] sm:$0x1] %vm335, %v334
        $region44: #{tpu_custom_call.1} parent=27 // pred_fallthru
          _
        %p337 = scmp.lt.s32.totalorder %s23, 1
        %s338 = scalar_select %p337, %s23, 1
        %s339 = scalar_lea.vmem %s2, %s338
        // Predicated region
        $region45: #{tpu_custom_call.1} parent=27 // pred_check
          %p340 = pneg %p105
        $region46: #{tpu_custom_call.1} parent=27 // pred_check_branch
          %342 = sbr.rel (%p340) target = $region48
        $region47: #{tpu_custom_call.1} parent=27 // pred_region
          _
        $region48: #{tpu_custom_call.1} parent=27 // pred_fallthru
          _
      $region28: #{tpu_custom_call.1} parent=5 // pred_fallthru
        _
      %p343 = scmp.le.s32.totalorder 2, %s14
      // Predicated region
      $region49: #{tpu_custom_call.1} parent=5 // pred_check
        %p344 = pneg %p343
      $region50: #{tpu_custom_call.1} parent=5 // pred_check_branch
        %346 = sbr.rel (%p344) target = $region52
      $region51: #{tpu_custom_call.1} parent=5 // pred_region
        %s347 = ssub.s32 %s14, 2
        // Predicated region
        $region53: #{tpu_custom_call.1} parent=51 // pred_check
          %p348 = pneg %p111
        $region54: #{tpu_custom_call.1} parent=51 // pred_check_branch
          %350 = sbr.rel (%p348) target = $region56
        $region55: #{tpu_custom_call.1} parent=51 // pred_region
          %p351 = scmp.lt.s32.totalorder %s25, 1
          %s352 = scalar_select %p351, %s25, 1
          %s353 = scalar_lea.vmem %s2, %s352
        $region56: #{tpu_custom_call.1} parent=51 // pred_fallthru
          _
      $region52: #{tpu_custom_call.1} parent=5 // pred_fallthru
        _
    $region6: #{tpu_custom_call.1} parent=1 // loop_footer
      %s18 = sadd.s32 1, %s14
    $region7: #{tpu_custom_call.1} parent=1 // loop_footer_branch
      %13 = sbr.rel target = $region3
    $region8: #{tpu_custom_call.1} parent=1 // loop_exit
      _
    %354 = vsyncpa [#allocation4], 1
    %s355 = scalar_lea.sflag [#allocation4], 1
    %356 = vsyncpa %s355, 1
    %357 = vsyncpa [#allocation6], 1
    %s358 = scalar_lea.sflag [#allocation6], 1
    %359 = vsyncpa %s358, 1

</llo_original>
